<compile_context>
chip_gen: v5e
topology: v5e:2x2
jax: 0.10.0
libtpu: 0.0.40
codegen_flags: <defaults>
</compile_context>

<pallas_src>
import jax
import jax.numpy as jnp
from jax.experimental import pallas as pl
from jax.experimental.pallas import tpu as pltpu


# ------------------------------- helpers ------------------------------------

def _round_up(x, m):
    return ((x + m - 1) // m) * m


def _choose_k_tile(d_padded, batch):
    """Largest 128-multiple divisor of Dp whose double-buffered f32 footprint
    (x tile (B,tk) + w row (1,tk), x2 for double buffering) stays <= ~8 MiB.
    Safe within the scoped-VMEM defaults of v5e/v6e/v7x."""
    bytes_per_col = 4 * (batch + 1) * 2          # f32, (x + w) rows, double-buffered
    budget = 8 * 1024 * 1024
    if d_padded * bytes_per_col <= budget:
        return d_padded                          # single block, single grid step
    best = 128
    t = 128
    while t <= d_padded:
        if d_padded % t == 0 and t * bytes_per_col <= budget:
            best = t
        t += 128
    return best


# ----------------------------- Pallas kernel --------------------------------

def _scorer_kernel(x_ref, w_ref, c_ref, o_ref, acc_ref):
    # Grid axis 0 tiles the reduction (K = flattened image) dimension.
    k = pl.program_id(0)

    @pl.when(k == 0)
    def _init():
        acc_ref[...] = jnp.zeros_like(acc_ref)

    # Folded-MLP partial dot: VPU multiply (broadcast over batch rows) + XLU lane
    # reduction into the resident (B, 1) f32 accumulator. No MXU pass needed.
    acc_ref[...] += jnp.sum(x_ref[...] * w_ref[...], axis=-1, keepdims=True)

    # Write the output every step (tiny); only the last step's value is kept since the
    # output block index is constant across the reduction axis.
    o_ref[...] = acc_ref[...] + c_ref[0, 0]


# --------------------------- parameter handling -----------------------------

def init_params(key, in_features, hidden=500):
    """Mimics torch.nn.Linear default init: U(-1/sqrt(fan_in), 1/sqrt(fan_in))."""
    k1, k2, k3, k4 = jax.random.split(key, 4)
    bound1 = 1.0 / jnp.sqrt(in_features)
    bound2 = 1.0 / jnp.sqrt(hidden)
    w1 = jax.random.uniform(k1, (in_features, hidden), jnp.float32, -bound1, bound1)
    b1 = jax.random.uniform(k2, (hidden,), jnp.float32, -bound1, bound1)
    w2 = jax.random.uniform(k3, (hidden, 1), jnp.float32, -bound2, bound2)
    b2 = jax.random.uniform(k4, (1,), jnp.float32, -bound2, bound2)
    return w1, b1, w2, b2


def prepare_scorer_params(w1, b1, w2, b2):
    """One-time weight preprocessing (load time, outside the hot path).

    The two activation-free Linear layers are folded into a single projection:
        w_eff = W1 @ W2   (D,)        c_eff = b1 . W2 + b2   (scalar)
    Fold is done in f32. D is zero-padded to a multiple of 128 so every K tile is
    lane-dense; w_eff is laid out as a (1, Dp) row for the VPU broadcast, c_eff as a
    (1, 1) SMEM scalar."""
    D, Hd = w1.shape
    Dp = _round_up(D, 128)
    w1f = w1.astype(jnp.float32)
    w2f = w2.astype(jnp.float32).reshape(Hd)
    b1f = b1.astype(jnp.float32)
    b2f = jnp.asarray(b2, jnp.float32).reshape(())

    w_eff = w1f @ w2f                                # (D,)
    c_eff = jnp.dot(b1f, w2f) + b2f                  # scalar

    w_row = jnp.zeros((1, Dp), jnp.float32).at[0, :D].set(w_eff)
    c = c_eff.reshape(1, 1)
    return w_row, c


# ------------------------------ forward pass --------------------------------

def baseline_scorer_forward(x, params):
    """x: (B, N, H, W) f32.  Returns (scores (B,), intermediate_segmented_images)."""
    w_row, c = params
    B, N, H, W = x.shape
    D = N * H * W
    Dp = w_row.shape[1]

    # TODO(synk): the frozen AttentionUNet LGE_segmenter is loaded from an external .pt
    # checkpoint and its architecture is not available in-script, so the segmentation
    # stage is an identity pass-through; the input is exposed as the "segmented"
    # intermediate (mirrors .clone().detach()).
    intermediate_segmented_images = x

    x_flat = x.reshape(B, D).astype(jnp.float32)
    if Dp != D:
        x_flat = jnp.zeros((B, Dp), jnp.float32).at[:, :D].set(x_flat)

    tk = _choose_k_tile(Dp, B)
    nk = Dp // tk

    out = pl.pallas_call(
        _scorer_kernel,
        out_shape=jax.ShapeDtypeStruct((B, 1), jnp.float32),
        grid_spec=pltpu.PrefetchScalarGridSpec(
            num_scalar_prefetch=0,
            grid=(nk,),
            in_specs=[
                pl.BlockSpec((B, tk), lambda k: (0, k)),       # x (f32), K-tiled
                pl.BlockSpec((1, tk), lambda k: (0, k)),       # folded weight row
                pl.BlockSpec((1, 1), lambda k: (0, 0),
                             memory_space=pltpu.MemorySpace.SMEM),  # folded bias
            ],
            out_specs=pl.BlockSpec((B, 1), lambda k: (0, 0)),
            scratch_shapes=[pltpu.VMEM((B, 1), jnp.float32)],
        ),
        compiler_params=pltpu.CompilerParams(
            dimension_semantics=("arbitrary",),    # K is a reduction axis
        ),
    )(x_flat, w_row, c)

    return out[:, 0], intermediate_segmented_images   # squeeze(1)


# ----------------------------------- main ------------------------------------

if __name__ == "__main__":
    # Small shapes consistent with the forward: batch=2, n_slices=3, spatial 16x16.
    B, N, H, W = 2, 3, 16, 16
    D = N * H * W          # 768 (lane-dense multiple of 128)
    HIDDEN = 500           # matches dense_layer out_features

    key = jax.random.PRNGKey(0)
    kx, kp = jax.random.split(key)
    x = jax.random.normal(kx, (B, N, H, W), dtype=jnp.float32)
    w1, b1, w2, b2 = init_params(kp, D, HIDDEN)
    params = prepare_scorer_params(w1, b1, w2, b2)

    scores, seg_imgs = baseline_scorer_forward(x, params)
    scores = jax.block_until_ready(scores)
    seg_imgs = jax.block_until_ready(seg_imgs)

    # Reference in plain JAX, un-folded, matching the torch f32 forward (with the same
    # identity-segmenter assumption). The fold only re-associates f32 sums.
    x_flat = x.reshape(B, D)
    h_ref = x_flat @ w1 + b1.reshape(1, HIDDEN)
    ref = h_ref @ w2 + b2.reshape(1, 1)     # (B, 1) f32

    assert scores.shape == (B,)
    assert seg_imgs.shape == (B, N, H, W)
    assert jnp.allclose(scores, ref[:, 0], atol=1e-3, rtol=1e-3)

    print("KERNEL_OK")
</pallas_src>

<mosaic_0001>
module attributes {stable_mosaic.version = 11 : i64} {
  func.func @_scorer_kernel(%arg0: i32, %arg1: memref<2x768xf32, #tpu.memory_space<vmem>>, %arg2: memref<1x768xf32, #tpu.memory_space<vmem>>, %arg3: memref<1x1xf32, #tpu.memory_space<smem>>, %arg4: memref<2x1xf32, #tpu.memory_space<vmem>>, %arg5: memref<2x1xf32, #tpu.memory_space<vmem>>) attributes {dimension_semantics = [#tpu.dimension_semantics<arbitrary>], iteration_bounds = array<i64: 1>, scalar_prefetch = 0 : i64, scratch_operands = 1 : i64, tpu.core_type = #tpu.core_type<tc>, window_params = [{transform_indices = @transform_0, window_bounds = array<i64: 2, 768>}, {transform_indices = @transform_1, window_bounds = array<i64: 1, 768>}, {transform_indices = @transform_2, window_bounds = array<i64: 1, 1>}, {pipeline_mode = #tpu.pipeline_mode<synchronous>, transform_indices = @transform_3, window_bounds = array<i64: 2, 1>}]} {
    %c0_i32 = arith.constant 0 : i32
    %0 = arith.cmpi eq, %arg0, %c0_i32 : i32
    %1 = arith.extui %0 : i1 to i32
    %c0_i32_0 = arith.constant 0 : i32
    %2 = arith.cmpi ne, %1, %c0_i32_0 : i32
    scf.if %2 {
      %cst_14 = arith.constant 0.000000e+00 : f32
      %17 = vector.broadcast %cst_14 : f32 to vector<2x1xf32>
      %c0_15 = arith.constant 0 : index
      %c0_16 = arith.constant 0 : index
      %18 = vector.load %arg5[%c0_15, %c0_16] : memref<2x1xf32, #tpu.memory_space<vmem>>, vector<2x1xf32>
      tpu.vector_store %arg5[%c0_15, %c0_16], %17 {strides = array<i32>} : memref<2x1xf32, #tpu.memory_space<vmem>>, vector<2x1xf32>,
    } else {
    }
    %c0 = arith.constant 0 : index
    %c0_1 = arith.constant 0 : index
    %3 = vector.load %arg5[%c0, %c0_1] : memref<2x1xf32, #tpu.memory_space<vmem>>, vector<2x1xf32>
    %c0_2 = arith.constant 0 : index
    %c0_3 = arith.constant 0 : index
    %4 = vector.load %arg1[%c0_2, %c0_3] : memref<2x768xf32, #tpu.memory_space<vmem>>, vector<2x768xf32>
    %c0_4 = arith.constant 0 : index
    %c0_5 = arith.constant 0 : index
    %5 = vector.load %arg2[%c0_4, %c0_5] : memref<1x768xf32, #tpu.memory_space<vmem>>, vector<1x768xf32>
    %6 = vector.broadcast %5 : vector<1x768xf32> to vector<2x768xf32>
    %7 = arith.mulf %4, %6 : vector<2x768xf32>
    %cst = arith.constant dense<0.000000e+00> : vector<2xf32>
    %8 = vector.multi_reduction <add>, %7, %cst [1] : vector<2x768xf32> to vector<2xf32>
    %9 = vector.shape_cast %8 : vector<2xf32> to vector<2x1xf32>
    %10 = arith.addf %3, %9 : vector<2x1xf32>
    %c0_6 = arith.constant 0 : index
    %c0_7 = arith.constant 0 : index
    %11 = vector.load %arg5[%c0_6, %c0_7] : memref<2x1xf32, #tpu.memory_space<vmem>>, vector<2x1xf32>
    tpu.vector_store %arg5[%c0_6, %c0_7], %10 {strides = array<i32>} : memref<2x1xf32, #tpu.memory_space<vmem>>, vector<2x1xf32>,
    %c0_8 = arith.constant 0 : index
    %c0_9 = arith.constant 0 : index
    %12 = vector.load %arg5[%c0_8, %c0_9] : memref<2x1xf32, #tpu.memory_space<vmem>>, vector<2x1xf32>
    %c0_10 = arith.constant 0 : index
    %c0_11 = arith.constant 0 : index
    %13 = memref.load %arg3[%c0_10, %c0_11] : memref<1x1xf32, #tpu.memory_space<smem>>
    %14 = vector.broadcast %13 : f32 to vector<2x1xf32>
    %15 = arith.addf %12, %14 : vector<2x1xf32>
    %c0_12 = arith.constant 0 : index
    %c0_13 = arith.constant 0 : index
    %16 = vector.load %arg4[%c0_12, %c0_13] : memref<2x1xf32, #tpu.memory_space<vmem>>, vector<2x1xf32>
    tpu.vector_store %arg4[%c0_12, %c0_13], %15 {strides = array<i32>} : memref<2x1xf32, #tpu.memory_space<vmem>>, vector<2x1xf32>,
    return
  }
  func.func @transform_0(%arg0: i32) -> (i32, i32) {
    %c0_i32 = arith.constant 0 : i32
    %c0_i32_0 = arith.constant 0 : i32
    return %c0_i32, %arg0 : i32, i32
  }
  func.func @transform_1(%arg0: i32) -> (i32, i32) {
    %c0_i32 = arith.constant 0 : i32
    %c0_i32_0 = arith.constant 0 : i32
    return %c0_i32, %arg0 : i32, i32
  }
  func.func @transform_2(%arg0: i32) -> (i32, i32) {
    %c0_i32 = arith.constant 0 : i32
    %c0_i32_0 = arith.constant 0 : i32
    %c0_i32_1 = arith.constant 0 : i32
    return %c0_i32, %c0_i32_0 : i32, i32
  }
  func.func @transform_3(%arg0: i32) -> (i32, i32) {
    %c0_i32 = arith.constant 0 : i32
    %c0_i32_0 = arith.constant 0 : i32
    %c0_i32_1 = arith.constant 0 : i32
    return %c0_i32, %c0_i32_0 : i32, i32
  }
}

</mosaic_0001>

<llo_original>
// kernel: tpu_custom_call.1
$region0: #{tpu_custom_call.1}
  #allocation0 [shape = 'u32[]', space=smem, size = 0x4, offset = 0x4, fixed_abs, tag = 'smem constant byte address 0x4 - core index']
  #allocation1 [shape = 'u32[72,128]{1,0:T(1,128)}', space=vmem, size = 0x9000, scoped, tag = 'internal scratch']
  #allocation2 [shape = 'f32[2,1]{1,0:T(2,128)}', space=vmem, size = 0x400, scoped, tag = 'scratch operand']
  #allocation3 [shape = 'f32[1,1]{1,0:T(1,128)S(6)}', space=smem, size = 0x200, scoped, tag = 'scoped memory for tpu_custom_call.1']
  %s0 = inlined_call_operand.hbm [shape: f32[2,768], index: 0, kind: input, shape index: {}]
  %s1 = inlined_call_operand.hbm [shape: f32[1,768], index: 1, kind: input, shape index: {}]
  %s2 = inlined_call_operand.<no memory space> [shape: f32[1,1], index: 2, kind: input, shape index: {}]
  %s3 = inlined_call_operand.vmem [shape: f32[2,1], index: 3, kind: output, shape index: {}]
  %s4 = sld [smem:[#allocation0]]
  $region34: #{tpu_custom_call.1} parent=0
    _
  %s6 = ssub.s32 1, %s4
  %s7 = scalar_select 0, %s6, %s4
  %8 = sst [smem:[#allocation3]] %s2
  $region1: #{tpu_custom_call.1} parent=0
    #allocation4 [shape = 'u8[6144]{0}', space=vmem, size = 0x1800, scoped, tag = 'input window, operand 0, single buffered']
    #allocation5 [shape = 's32[1]{0}', space=sflag, size = 0x4, scoped, tag = 'scoped memory for tpu_custom_call.1']
    #allocation6 [shape = 'u8[3072]{0}', space=vmem, size = 0xc00, scoped, tag = 'input window, operand 1, single buffered']
    #allocation7 [shape = 's32[1]{0}', space=sflag, size = 0x4, scoped, tag = 'scoped memory for tpu_custom_call.1']
    %9 = vsyncpa [#allocation5], 0
    %10 = vsyncpa [#allocation7], 0
    // Predicated region
    $region2: #{tpu_custom_call.1} parent=1 // pred_check
      _
    $region3: #{tpu_custom_call.1} parent=1 // pred_check_branch
      %12 = sbr.rel (0) target = $region5
    $region4: #{tpu_custom_call.1} parent=1 // pred_region
      %14 = vsyncadd [#allocation5], 0
      %s16 = sshll.u32 %s0, 4
      %s17 = int_to_ptr.hbm [resolvable:$true] %s16
      %s18 = sshll.u32 [#allocation4], 4
      %s19 = int_to_ptr.vmem [resolvable:$true] %s18
      %21 = dma.hbm_to_vmem [thread:$0]  %s17, 192, %s19, [#allocation5]
    $region5: #{tpu_custom_call.1} parent=1 // pred_fallthru
      _
    // Predicated region
    $region6: #{tpu_custom_call.1} parent=1 // pred_check
      _
    $region7: #{tpu_custom_call.1} parent=1 // pred_check_branch
      %23 = sbr.rel (0) target = $region9
    $region8: #{tpu_custom_call.1} parent=1 // pred_region
      %25 = vsyncadd [#allocation7], 0
      %s27 = sshll.u32 %s1, 4
      %s28 = int_to_ptr.hbm [resolvable:$true] %s27
      %s29 = sshll.u32 [#allocation6], 4
      %s30 = int_to_ptr.vmem [resolvable:$true] %s29
      %32 = dma.hbm_to_vmem [thread:$0]  %s28, 96, %s30, [#allocation7]
    $region9: #{tpu_custom_call.1} parent=1 // pred_fallthru
      _
    // Predicated region
    $region10: #{tpu_custom_call.1} parent=1 // pred_check
      _
    $region11: #{tpu_custom_call.1} parent=1 // pred_check_branch
      %34 = sbr.rel (0) target = $region13
    $region12: #{tpu_custom_call.1} parent=1 // pred_region
      _
    $region13: #{tpu_custom_call.1} parent=1 // pred_fallthru
      _
    // Predicated region
    $region14: #{tpu_custom_call.1} parent=1 // pred_check
      _
    $region15: #{tpu_custom_call.1} parent=1 // pred_check_branch
      %36 = sbr.rel (0) target = $region17
    $region16: #{tpu_custom_call.1} parent=1 // pred_region
      %38 = dma.done [#allocation5], 192
    $region17: #{tpu_custom_call.1} parent=1 // pred_fallthru
      _
    // Predicated region
    $region18: #{tpu_custom_call.1} parent=1 // pred_check
      _
    $region19: #{tpu_custom_call.1} parent=1 // pred_check_branch
      %40 = sbr.rel (0) target = $region21
    $region20: #{tpu_custom_call.1} parent=1 // pred_region
      %42 = dma.done [#allocation7], 96
    $region21: #{tpu_custom_call.1} parent=1 // pred_fallthru
      _
    %p43 = scmp.eq.s32.totalorder 0, 0
    // Predicated region
    $region22: #{tpu_custom_call.1} parent=1 // pred_check
      %p44 = pneg %p43
    $region23: #{tpu_custom_call.1} parent=1 // pred_check_branch
      %46 = sbr.rel (%p44) target = $region25
    $region24: #{tpu_custom_call.1} parent=1 // pred_region
      %vm47 = vcmask 1024
      %48 = vst.msk [vmem:[#allocation2] sm:$0x3] %vm47, 0.0
    $region25: #{tpu_custom_call.1} parent=1 // pred_fallthru
      _
    %v49 = vld [vmem:[#allocation2] sm:$0x3]
    %v50 = vld [vmem:[#allocation4] sm:$0xff]
    %v51 = vld [vmem:[#allocation4 + $0x8] sm:$0xf]
    %v52 = vld [vmem:[#allocation6] sm:$0x3f]
    %v54 = vperm.slane %v52, 0
    %v55 = vperm.slane %v52, 1
    %v56 = vperm.slane %v52, 2
    %v57 = vperm.slane %v52, 3
    %v58 = vperm.slane %v52, 4
    %v59 = vperm.slane %v52, 5
    %v60 = vrot.slane %v55, 6
    %v61 = vrot.slane %v56, 4
    %v62 = vrot.slane %v57, 2
    %v63 = vrot.slane %v59, 6
    %vm64 = vcmask 1041408
    %v65 = vsel %vm64, %v54, %v60
    %vm66 = vcmask 1045508
    %v67 = vsel %vm66, %v61, %v62
    %vm68 = vcmask 1043456
    %v69 = vsel %vm68, %v65, %v67
    %v70 = vsel %vm64, %v58, %v63
    %v73 = vmul.f32 %v50, %v69
    %v74 = vmul.f32 %v51, %v70
    %77 = vst [vmem:[#allocation1] ss:$4 sm:$0xff] %v73
    %s78 = scalar_lea.vmem [#allocation1], 32
    %79 = vst [vmem:[%s78] ss:$4 sm:$0xff] %v74
    %v80 = vld.sshfl [vmem:[#allocation1] sm:$0xff pattern:$0x73625140]
    %v81 = vld.sshfl [vmem:[#allocation1 + $0x8] sm:$0xff pattern:$0x73625140]
    %v82 = vld.sshfl [vmem:[#allocation1 + $0x10] sm:$0xff pattern:$0x73625140]
    %v83 = vld.sshfl [vmem:[#allocation1 + $0x18] sm:$0xff pattern:$0x73625140]
    %v84 = vld.sshfl [vmem:[#allocation1 + $0x20] sm:$0xff pattern:$0x73625140]
    %v85 = vld.sshfl [vmem:[#allocation1 + $0x28] sm:$0xff pattern:$0x73625140]
    %v92 = vsel %vm64, %v80, 0.0
    %v93 = vsel %vm64, %v81, 0.0
    %v94 = vadd.f32 %v92, %v93
    %v95 = vsel %vm64, %v82, 0.0
    %v96 = vadd.f32 %v94, %v95
    %v97 = vsel %vm64, %v83, 0.0
    %v98 = vadd.f32 %v96, %v97
    %v99 = vsel %vm64, %v84, 0.0
    %v100 = vadd.f32 %v98, %v99
    %v101 = vsel %vm64, %v85, 0.0
    %v102 = vadd.f32 %v100, %v101
    %103 = vadd.xlane.f32.xlu0 %v102
    %v104 = vpop.xlane.xlu0 %103
    %v105 = vadd.f32 %v49, %v104
    %vm106 = vcmask 1024
    %107 = vst.msk [vmem:[#allocation2] sm:$0x3] %vm106, %v105
    %v108 = vld [vmem:[#allocation2] sm:$0x3]
    %s109 = sld [smem:[#allocation3]]
    %v110 = vstv %s109
    %v111 = vadd.f32 %v108, %v110
    %112 = vst.msk [vmem:[%s3] sm:$0x3] %vm106, %v111
    // Predicated region
    $region26: #{tpu_custom_call.1} parent=1 // pred_check
      _
    $region27: #{tpu_custom_call.1} parent=1 // pred_check_branch
      %114 = sbr.rel (0) target = $region29
    $region28: #{tpu_custom_call.1} parent=1 // pred_region
      _
    $region29: #{tpu_custom_call.1} parent=1 // pred_fallthru
      _
    // Predicated region
    $region30: #{tpu_custom_call.1} parent=1 // pred_check
      _
    $region31: #{tpu_custom_call.1} parent=1 // pred_check_branch
      %116 = sbr.rel (0) target = $region33
    $region32: #{tpu_custom_call.1} parent=1 // pred_region
      _
    $region33: #{tpu_custom_call.1} parent=1 // pred_fallthru
      _
    %117 = vsyncpa [#allocation5], 1
    %118 = vsyncpa [#allocation7], 1

</llo_original>
